<compile_context>
chip_gen: v7x
topology: tpu7x:2x2x1
jax: 0.10.0
libtpu: 0.0.40
codegen_flags: <defaults>
</compile_context>

<pallas_src>
import jax
import jax.numpy as jnp
from jax.experimental import pallas as pl
from jax.experimental.pallas import tpu as pltpu


def _make_fcn_kernel(S, B, E):
    """Kernel closure over the static sequence/batch/embedding sizes."""

    def kernel(emb_ref,        # (S*B, E)  embeddings, position-major ([pos0 batch rows, pos1 ...])
               rproj_w_ref,    # (E, 2E)   [attn_W^T | out_W^T r-block], fused along N
               rproj_b_ref,    # (1, 2E)   [attn_b   | out_b]
               out_wc_ref,     # (2E, E)   out_W^T child blocks [c1 ; c2]
               tag_w_ref,      # (E, T)
               tag_b_ref,      # (1, T)
               y_ref,          # (S*B, T)  output (position-major)
               h_all):         # VMEM scratch (S*B, E): per-position hidden states
        # ---- Prologue: batched, recurrence-independent projections ----------
        r_all = jnp.maximum(emb_ref[...], 0.0)                       # relu(r) for all positions
        proj = (jnp.dot(r_all, rproj_w_ref[...],
                        preferred_element_type=jnp.float32)
                + rproj_b_ref[...])                                  # (S*B, 2E)
        # proj[:, :E] = attn(r)                    (attn bias folded in)
        # proj[:, E:] = r-contribution of Linear_out (out bias folded in)

        # ---- Serial recurrence over the sequence (fully unrolled; S static) --
        h1 = jnp.zeros((B, E), jnp.float32)       # hidden[i-1] (post-ReLU => >= 0)
        h2 = jnp.zeros((B, E), jnp.float32)       # hidden[i-2]
        for i in range(S):
            p = proj[i * B:(i + 1) * B]           # (B, 2E) static slice
            attn = p[:, :E]
            # Children are previous hidden states (already ReLU'd) or zeros,
            # so the module's relu(cs) is a no-op here.
            a12 = jnp.maximum(
                jnp.concatenate([attn * h1, attn * h2], axis=-1), 0.0)   # (B, 2E)
            h = jnp.maximum(
                p[:, E:] + jnp.dot(a12, out_wc_ref[...],
                                   preferred_element_type=jnp.float32),
                0.0)                                                     # (B, E)
            h_all[i * B:(i + 1) * B, :] = h
            h2 = h1
            h1 = h

        # ---- Epilogue: batched tag projection + log_softmax, one slab store --
        z = (jnp.dot(h_all[...], tag_w_ref[...],
                     preferred_element_type=jnp.float32) + tag_b_ref[...])   # (S*B, T)
        m = jnp.max(z, axis=-1, keepdims=True)
        s = z - m
        y_ref[...] = s - jnp.log(jnp.sum(jnp.exp(s), axis=-1, keepdims=True))

    return kernel


def fcn_segmenter_forward(x, params, *, tagset_size):
    """x: int32 (batch, seq) token ids.  Returns (batch, tagset, seq) float32."""
    (emb_table, attn_w, attn_b, out_w, out_b, tag_w, tag_b) = params
    B, S = x.shape
    E = emb_table.shape[1]
    T = tagset_size

    # Embedding lookup + layout (glue, plain JAX): (B,S,E) -> (S,B,E) -> (S*B, E)
    emb = jnp.take(emb_table, x, axis=0).astype(jnp.float32)
    emb_flat = jnp.transpose(emb, (1, 0, 2)).reshape(S * B, E)

    # PyTorch Linear does x @ W.T + b.  Pre-transpose once and fuse the two
    # projections that share LHS r (attn and the r-block of Linear_out) along N,
    # folding both biases in so the serial loop has no bias adds.
    out_wT = out_w.T                                                 # (3E, E): [r | c1 | c2]
    rproj_w = jnp.concatenate([attn_w.T, out_wT[:E]], axis=1)        # (E, 2E)
    rproj_b = jnp.concatenate([attn_b, out_b]).reshape(1, 2 * E)     # (1, 2E)
    out_wc = out_wT[E:]                                              # (2E, E) child blocks
    tag_wT = tag_w.T                                                 # (E, T)
    tag_b2 = tag_b.reshape(1, T)

    # VMEM budget sanity check (only matters if E/T/S are scaled up):
    # v7x has 64 MiB VMEM per TensorCore vs 128 MiB on v5e/v6e.
    vmem_bytes = 4 * (emb_flat.size + rproj_w.size + rproj_b.size + out_wc.size
                      + tag_wT.size + tag_b2.size + S * B * (T + E))
    assert vmem_bytes < 60 * 1024 * 1024, "working set would exceed v7x VMEM"

    vmem_spec = lambda: pl.BlockSpec(memory_space=pltpu.MemorySpace.VMEM)
    y_flat = pl.pallas_call(
        _make_fcn_kernel(S, B, E),
        out_shape=jax.ShapeDtypeStruct((S * B, T), jnp.float32),
        in_specs=[vmem_spec() for _ in range(6)],
        out_specs=vmem_spec(),
        scratch_shapes=[pltpu.VMEM((S * B, E), jnp.float32)],
    )(emb_flat, rproj_w, rproj_b, out_wc, tag_wT, tag_b2)

    # (S*B, T) -> (S, B, T) -> (B, T, S)   (matches PyTorch y[:, :, i] = yy)
    return jnp.transpose(y_flat.reshape(S, B, T), (1, 2, 0))


def init_params(key, *, vocab_size, tagset_size, pad_token, embedding_size):
    """Deterministic PyTorch-like init (uniform +-1/sqrt(fan_in); N(0,1) embedding)."""
    E = embedding_size
    k = jax.random.split(key, 7)

    emb_table = jax.random.normal(k[0], (vocab_size + 1, E), jnp.float32)
    emb_table = emb_table.at[pad_token].set(0.0)    # padding_idx row is zero

    def lin(kw, kb, fan_in, fan_out):
        bound = 1.0 / jnp.sqrt(float(fan_in))
        w = jax.random.uniform(kw, (fan_out, fan_in), jnp.float32, -bound, bound)
        b = jax.random.uniform(kb, (fan_out,), jnp.float32, -bound, bound)
        return w, b

    attn_w, attn_b = lin(k[1], k[2], E, E)                 # nn.Linear(E, E)
    out_w, out_b = lin(k[3], k[4], 3 * E, E)               # nn.Linear((1+spread)*E, E), spread=2
    tag_w, tag_b = lin(k[5], k[6], E, tagset_size)         # nn.Linear(E, tagset)
    return (emb_table, attn_w, attn_b, out_w, out_b, tag_w, tag_b)


if __name__ == "__main__":
    vocab_size = 20
    tagset_size = 5
    pad_token = 0
    embedding_size = 16       # module default config['embedding_size'] = 16
    batch, seq = 2, 8

    key = jax.random.PRNGKey(0)
    k_param, k_x = jax.random.split(key)

    params = init_params(k_param, vocab_size=vocab_size, tagset_size=tagset_size,
                         pad_token=pad_token, embedding_size=embedding_size)
    x = jax.random.randint(k_x, (batch, seq), 1, vocab_size + 1, dtype=jnp.int32)

    y = fcn_segmenter_forward(x, params, tagset_size=tagset_size)
    y = jax.block_until_ready(y)

    assert y.shape == (batch, tagset_size, seq)
    assert bool(jnp.all(jnp.isfinite(y)))
    # log_softmax sanity: each column's probabilities sum to ~1
    assert bool(jnp.allclose(jnp.sum(jnp.exp(y), axis=1), 1.0, atol=1e-4))
    print("KERNEL_OK")
</pallas_src>

<mosaic_0001>
module attributes {stable_mosaic.version = 11 : i64} {
  func.func @kernel(%arg0: memref<16x16xf32, #tpu.memory_space<vmem>>, %arg1: memref<16x32xf32, #tpu.memory_space<vmem>>, %arg2: memref<1x32xf32, #tpu.memory_space<vmem>>, %arg3: memref<32x16xf32, #tpu.memory_space<vmem>>, %arg4: memref<16x5xf32, #tpu.memory_space<vmem>>, %arg5: memref<1x5xf32, #tpu.memory_space<vmem>>, %arg6: memref<16x5xf32, #tpu.memory_space<vmem>>, %arg7: memref<16x16xf32, #tpu.memory_space<vmem>>) attributes {dimension_semantics = [], scalar_prefetch = 0 : i64, scratch_operands = 1 : i64, tpu.core_type = #tpu.core_type<tc>} {
    %c0 = arith.constant 0 : index
    %c0_0 = arith.constant 0 : index
    %0 = vector.load %arg0[%c0, %c0_0] : memref<16x16xf32, #tpu.memory_space<vmem>>, vector<16x16xf32>
    %cst = arith.constant 0.000000e+00 : f32
    %1 = vector.broadcast %cst : f32 to vector<16x16xf32>
    %2 = arith.maximumf %0, %1 : vector<16x16xf32>
    %c0_1 = arith.constant 0 : index
    %c0_2 = arith.constant 0 : index
    %3 = vector.load %arg1[%c0_1, %c0_2] : memref<16x32xf32, #tpu.memory_space<vmem>>, vector<16x32xf32>
    %cst_3 = arith.constant dense<0.000000e+00> : vector<16x32xf32>
    %4 = tpu.matmul %2, %3, %cst_3 {dimension_numbers = #tpu.dot_dimension_numbers<[1], [0], [0], [1], [0, 0, 1, 1], [], []>} : vector<16x16xf32>, vector<16x32xf32>, vector<16x32xf32> -> vector<16x32xf32>
    %c0_4 = arith.constant 0 : index
    %c0_5 = arith.constant 0 : index
    %5 = vector.load %arg2[%c0_4, %c0_5] : memref<1x32xf32, #tpu.memory_space<vmem>>, vector<1x32xf32>
    %6 = vector.broadcast %5 : vector<1x32xf32> to vector<16x32xf32>
    %7 = arith.addf %4, %6 : vector<16x32xf32>
    %cst_6 = arith.constant 0.000000e+00 : f32
    %8 = vector.broadcast %cst_6 : f32 to vector<2x16xf32>
    %cst_7 = arith.constant 0.000000e+00 : f32
    %9 = vector.broadcast %cst_7 : f32 to vector<2x16xf32>
    %10 = vector.extract_strided_slice %7 {offsets = [0, 0], sizes = [2, 32], strides = [1, 1]} : vector<16x32xf32> to vector<2x32xf32>
    %11 = vector.extract_strided_slice %10 {offsets = [0, 0], sizes = [2, 16], strides = [1, 1]} : vector<2x32xf32> to vector<2x16xf32>
    %12 = arith.mulf %11, %8 : vector<2x16xf32>
    %13 = arith.mulf %11, %9 : vector<2x16xf32>
    %14 = tpu.concatenate %12, %13 in 1 : vector<2x16xf32>, vector<2x16xf32> -> vector<2x32xf32>
    %cst_8 = arith.constant 0.000000e+00 : f32
    %15 = vector.broadcast %cst_8 : f32 to vector<2x32xf32>
    %16 = arith.maximumf %14, %15 : vector<2x32xf32>
    %17 = vector.extract_strided_slice %10 {offsets = [0, 16], sizes = [2, 16], strides = [1, 1]} : vector<2x32xf32> to vector<2x16xf32>
    %c0_9 = arith.constant 0 : index
    %c0_10 = arith.constant 0 : index
    %18 = vector.load %arg3[%c0_9, %c0_10] : memref<32x16xf32, #tpu.memory_space<vmem>>, vector<32x16xf32>
    %cst_11 = arith.constant dense<0.000000e+00> : vector<2x16xf32>
    %19 = tpu.matmul %16, %18, %cst_11 {dimension_numbers = #tpu.dot_dimension_numbers<[1], [0], [0], [1], [0, 0, 1, 1], [], []>} : vector<2x32xf32>, vector<32x16xf32>, vector<2x16xf32> -> vector<2x16xf32>
    %20 = arith.addf %17, %19 : vector<2x16xf32>
    %cst_12 = arith.constant 0.000000e+00 : f32
    %21 = vector.broadcast %cst_12 : f32 to vector<2x16xf32>
    %22 = arith.maximumf %20, %21 : vector<2x16xf32>
    %c0_13 = arith.constant 0 : index
    %c0_14 = arith.constant 0 : index
    %23 = vector.load %arg7[%c0_13, %c0_14] : memref<16x16xf32, #tpu.memory_space<vmem>>, vector<2x16xf32>
    tpu.vector_store %arg7[%c0_13, %c0_14], %22 {strides = array<i32>} : memref<16x16xf32, #tpu.memory_space<vmem>>, vector<2x16xf32>,
    %24 = vector.extract_strided_slice %7 {offsets = [2, 0], sizes = [2, 32], strides = [1, 1]} : vector<16x32xf32> to vector<2x32xf32>
    %25 = vector.extract_strided_slice %24 {offsets = [0, 0], sizes = [2, 16], strides = [1, 1]} : vector<2x32xf32> to vector<2x16xf32>
    %26 = arith.mulf %25, %22 : vector<2x16xf32>
    %27 = arith.mulf %25, %8 : vector<2x16xf32>
    %28 = tpu.concatenate %26, %27 in 1 : vector<2x16xf32>, vector<2x16xf32> -> vector<2x32xf32>
    %cst_15 = arith.constant 0.000000e+00 : f32
    %29 = vector.broadcast %cst_15 : f32 to vector<2x32xf32>
    %30 = arith.maximumf %28, %29 : vector<2x32xf32>
    %31 = vector.extract_strided_slice %24 {offsets = [0, 16], sizes = [2, 16], strides = [1, 1]} : vector<2x32xf32> to vector<2x16xf32>
    %c0_16 = arith.constant 0 : index
    %c0_17 = arith.constant 0 : index
    %32 = vector.load %arg3[%c0_16, %c0_17] : memref<32x16xf32, #tpu.memory_space<vmem>>, vector<32x16xf32>
    %cst_18 = arith.constant dense<0.000000e+00> : vector<2x16xf32>
    %33 = tpu.matmul %30, %32, %cst_18 {dimension_numbers = #tpu.dot_dimension_numbers<[1], [0], [0], [1], [0, 0, 1, 1], [], []>} : vector<2x32xf32>, vector<32x16xf32>, vector<2x16xf32> -> vector<2x16xf32>
    %34 = arith.addf %31, %33 : vector<2x16xf32>
    %cst_19 = arith.constant 0.000000e+00 : f32
    %35 = vector.broadcast %cst_19 : f32 to vector<2x16xf32>
    %36 = arith.maximumf %34, %35 : vector<2x16xf32>
    %c2 = arith.constant 2 : index
    %c0_20 = arith.constant 0 : index
    %37 = vector.load %arg7[%c2, %c0_20] : memref<16x16xf32, #tpu.memory_space<vmem>>, vector<2x16xf32>
    tpu.vector_store %arg7[%c2, %c0_20], %36 {strides = array<i32>} : memref<16x16xf32, #tpu.memory_space<vmem>>, vector<2x16xf32>,
    %38 = vector.extract_strided_slice %7 {offsets = [4, 0], sizes = [2, 32], strides = [1, 1]} : vector<16x32xf32> to vector<2x32xf32>
    %39 = vector.extract_strided_slice %38 {offsets = [0, 0], sizes = [2, 16], strides = [1, 1]} : vector<2x32xf32> to vector<2x16xf32>
    %40 = arith.mulf %39, %36 : vector<2x16xf32>
    %41 = arith.mulf %39, %22 : vector<2x16xf32>
    %42 = tpu.concatenate %40, %41 in 1 : vector<2x16xf32>, vector<2x16xf32> -> vector<2x32xf32>
    %cst_21 = arith.constant 0.000000e+00 : f32
    %43 = vector.broadcast %cst_21 : f32 to vector<2x32xf32>
    %44 = arith.maximumf %42, %43 : vector<2x32xf32>
    %45 = vector.extract_strided_slice %38 {offsets = [0, 16], sizes = [2, 16], strides = [1, 1]} : vector<2x32xf32> to vector<2x16xf32>
    %c0_22 = arith.constant 0 : index
    %c0_23 = arith.constant 0 : index
    %46 = vector.load %arg3[%c0_22, %c0_23] : memref<32x16xf32, #tpu.memory_space<vmem>>, vector<32x16xf32>
    %cst_24 = arith.constant dense<0.000000e+00> : vector<2x16xf32>
    %47 = tpu.matmul %44, %46, %cst_24 {dimension_numbers = #tpu.dot_dimension_numbers<[1], [0], [0], [1], [0, 0, 1, 1], [], []>} : vector<2x32xf32>, vector<32x16xf32>, vector<2x16xf32> -> vector<2x16xf32>
    %48 = arith.addf %45, %47 : vector<2x16xf32>
    %cst_25 = arith.constant 0.000000e+00 : f32
    %49 = vector.broadcast %cst_25 : f32 to vector<2x16xf32>
    %50 = arith.maximumf %48, %49 : vector<2x16xf32>
    %c4 = arith.constant 4 : index
    %c0_26 = arith.constant 0 : index
    %51 = vector.load %arg7[%c4, %c0_26] : memref<16x16xf32, #tpu.memory_space<vmem>>, vector<2x16xf32>
    tpu.vector_store %arg7[%c4, %c0_26], %50 {strides = array<i32>} : memref<16x16xf32, #tpu.memory_space<vmem>>, vector<2x16xf32>,
    %52 = vector.extract_strided_slice %7 {offsets = [6, 0], sizes = [2, 32], strides = [1, 1]} : vector<16x32xf32> to vector<2x32xf32>
    %53 = vector.extract_strided_slice %52 {offsets = [0, 0], sizes = [2, 16], strides = [1, 1]} : vector<2x32xf32> to vector<2x16xf32>
    %54 = arith.mulf %53, %50 : vector<2x16xf32>
    %55 = arith.mulf %53, %36 : vector<2x16xf32>
    %56 = tpu.concatenate %54, %55 in 1 : vector<2x16xf32>, vector<2x16xf32> -> vector<2x32xf32>
    %cst_27 = arith.constant 0.000000e+00 : f32
    %57 = vector.broadcast %cst_27 : f32 to vector<2x32xf32>
    %58 = arith.maximumf %56, %57 : vector<2x32xf32>
    %59 = vector.extract_strided_slice %52 {offsets = [0, 16], sizes = [2, 16], strides = [1, 1]} : vector<2x32xf32> to vector<2x16xf32>
    %c0_28 = arith.constant 0 : index
    %c0_29 = arith.constant 0 : index
    %60 = vector.load %arg3[%c0_28, %c0_29] : memref<32x16xf32, #tpu.memory_space<vmem>>, vector<32x16xf32>
    %cst_30 = arith.constant dense<0.000000e+00> : vector<2x16xf32>
    %61 = tpu.matmul %58, %60, %cst_30 {dimension_numbers = #tpu.dot_dimension_numbers<[1], [0], [0], [1], [0, 0, 1, 1], [], []>} : vector<2x32xf32>, vector<32x16xf32>, vector<2x16xf32> -> vector<2x16xf32>
    %62 = arith.addf %59, %61 : vector<2x16xf32>
    %cst_31 = arith.constant 0.000000e+00 : f32
    %63 = vector.broadcast %cst_31 : f32 to vector<2x16xf32>
    %64 = arith.maximumf %62, %63 : vector<2x16xf32>
    %c6 = arith.constant 6 : index
    %c0_32 = arith.constant 0 : index
    %65 = vector.load %arg7[%c6, %c0_32] : memref<16x16xf32, #tpu.memory_space<vmem>>, vector<2x16xf32>
    tpu.vector_store %arg7[%c6, %c0_32], %64 {strides = array<i32>} : memref<16x16xf32, #tpu.memory_space<vmem>>, vector<2x16xf32>,
    %66 = vector.extract_strided_slice %7 {offsets = [8, 0], sizes = [2, 32], strides = [1, 1]} : vector<16x32xf32> to vector<2x32xf32>
    %67 = vector.extract_strided_slice %66 {offsets = [0, 0], sizes = [2, 16], strides = [1, 1]} : vector<2x32xf32> to vector<2x16xf32>
    %68 = arith.mulf %67, %64 : vector<2x16xf32>
    %69 = arith.mulf %67, %50 : vector<2x16xf32>
    %70 = tpu.concatenate %68, %69 in 1 : vector<2x16xf32>, vector<2x16xf32> -> vector<2x32xf32>
    %cst_33 = arith.constant 0.000000e+00 : f32
    %71 = vector.broadcast %cst_33 : f32 to vector<2x32xf32>
    %72 = arith.maximumf %70, %71 : vector<2x32xf32>
    %73 = vector.extract_strided_slice %66 {offsets = [0, 16], sizes = [2, 16], strides = [1, 1]} : vector<2x32xf32> to vector<2x16xf32>
    %c0_34 = arith.constant 0 : index
    %c0_35 = arith.constant 0 : index
    %74 = vector.load %arg3[%c0_34, %c0_35] : memref<32x16xf32, #tpu.memory_space<vmem>>, vector<32x16xf32>
    %cst_36 = arith.constant dense<0.000000e+00> : vector<2x16xf32>
    %75 = tpu.matmul %72, %74, %cst_36 {dimension_numbers = #tpu.dot_dimension_numbers<[1], [0], [0], [1], [0, 0, 1, 1], [], []>} : vector<2x32xf32>, vector<32x16xf32>, vector<2x16xf32> -> vector<2x16xf32>
    %76 = arith.addf %73, %75 : vector<2x16xf32>
    %cst_37 = arith.constant 0.000000e+00 : f32
    %77 = vector.broadcast %cst_37 : f32 to vector<2x16xf32>
    %78 = arith.maximumf %76, %77 : vector<2x16xf32>
    %c8 = arith.constant 8 : index
    %c0_38 = arith.constant 0 : index
    %79 = vector.load %arg7[%c8, %c0_38] : memref<16x16xf32, #tpu.memory_space<vmem>>, vector<2x16xf32>
    tpu.vector_store %arg7[%c8, %c0_38], %78 {strides = array<i32>} : memref<16x16xf32, #tpu.memory_space<vmem>>, vector<2x16xf32>,
    %80 = vector.extract_strided_slice %7 {offsets = [10, 0], sizes = [2, 32], strides = [1, 1]} : vector<16x32xf32> to vector<2x32xf32>
    %81 = vector.extract_strided_slice %80 {offsets = [0, 0], sizes = [2, 16], strides = [1, 1]} : vector<2x32xf32> to vector<2x16xf32>
    %82 = arith.mulf %81, %78 : vector<2x16xf32>
    %83 = arith.mulf %81, %64 : vector<2x16xf32>
    %84 = tpu.concatenate %82, %83 in 1 : vector<2x16xf32>, vector<2x16xf32> -> vector<2x32xf32>
    %cst_39 = arith.constant 0.000000e+00 : f32
    %85 = vector.broadcast %cst_39 : f32 to vector<2x32xf32>
    %86 = arith.maximumf %84, %85 : vector<2x32xf32>
    %87 = vector.extract_strided_slice %80 {offsets = [0, 16], sizes = [2, 16], strides = [1, 1]} : vector<2x32xf32> to vector<2x16xf32>
    %c0_40 = arith.constant 0 : index
    %c0_41 = arith.constant 0 : index
    %88 = vector.load %arg3[%c0_40, %c0_41] : memref<32x16xf32, #tpu.memory_space<vmem>>, vector<32x16xf32>
    %cst_42 = arith.constant dense<0.000000e+00> : vector<2x16xf32>
    %89 = tpu.matmul %86, %88, %cst_42 {dimension_numbers = #tpu.dot_dimension_numbers<[1], [0], [0], [1], [0, 0, 1, 1], [], []>} : vector<2x32xf32>, vector<32x16xf32>, vector<2x16xf32> -> vector<2x16xf32>
    %90 = arith.addf %87, %89 : vector<2x16xf32>
    %cst_43 = arith.constant 0.000000e+00 : f32
    %91 = vector.broadcast %cst_43 : f32 to vector<2x16xf32>
    %92 = arith.maximumf %90, %91 : vector<2x16xf32>
    %c10 = arith.constant 10 : index
    %c0_44 = arith.constant 0 : index
    %93 = vector.load %arg7[%c10, %c0_44] : memref<16x16xf32, #tpu.memory_space<vmem>>, vector<2x16xf32>
    tpu.vector_store %arg7[%c10, %c0_44], %92 {strides = array<i32>} : memref<16x16xf32, #tpu.memory_space<vmem>>, vector<2x16xf32>,
    %94 = vector.extract_strided_slice %7 {offsets = [12, 0], sizes = [2, 32], strides = [1, 1]} : vector<16x32xf32> to vector<2x32xf32>
    %95 = vector.extract_strided_slice %94 {offsets = [0, 0], sizes = [2, 16], strides = [1, 1]} : vector<2x32xf32> to vector<2x16xf32>
    %96 = arith.mulf %95, %92 : vector<2x16xf32>
    %97 = arith.mulf %95, %78 : vector<2x16xf32>
    %98 = tpu.concatenate %96, %97 in 1 : vector<2x16xf32>, vector<2x16xf32> -> vector<2x32xf32>
    %cst_45 = arith.constant 0.000000e+00 : f32
    %99 = vector.broadcast %cst_45 : f32 to vector<2x32xf32>
    %100 = arith.maximumf %98, %99 : vector<2x32xf32>
    %101 = vector.extract_strided_slice %94 {offsets = [0, 16], sizes = [2, 16], strides = [1, 1]} : vector<2x32xf32> to vector<2x16xf32>
    %c0_46 = arith.constant 0 : index
    %c0_47 = arith.constant 0 : index
    %102 = vector.load %arg3[%c0_46, %c0_47] : memref<32x16xf32, #tpu.memory_space<vmem>>, vector<32x16xf32>
    %cst_48 = arith.constant dense<0.000000e+00> : vector<2x16xf32>
    %103 = tpu.matmul %100, %102, %cst_48 {dimension_numbers = #tpu.dot_dimension_numbers<[1], [0], [0], [1], [0, 0, 1, 1], [], []>} : vector<2x32xf32>, vector<32x16xf32>, vector<2x16xf32> -> vector<2x16xf32>
    %104 = arith.addf %101, %103 : vector<2x16xf32>
    %cst_49 = arith.constant 0.000000e+00 : f32
    %105 = vector.broadcast %cst_49 : f32 to vector<2x16xf32>
    %106 = arith.maximumf %104, %105 : vector<2x16xf32>
    %c12 = arith.constant 12 : index
    %c0_50 = arith.constant 0 : index
    %107 = vector.load %arg7[%c12, %c0_50] : memref<16x16xf32, #tpu.memory_space<vmem>>, vector<2x16xf32>
    tpu.vector_store %arg7[%c12, %c0_50], %106 {strides = array<i32>} : memref<16x16xf32, #tpu.memory_space<vmem>>, vector<2x16xf32>,
    %108 = vector.extract_strided_slice %7 {offsets = [14, 0], sizes = [2, 32], strides = [1, 1]} : vector<16x32xf32> to vector<2x32xf32>
    %109 = vector.extract_strided_slice %108 {offsets = [0, 0], sizes = [2, 16], strides = [1, 1]} : vector<2x32xf32> to vector<2x16xf32>
    %110 = arith.mulf %109, %106 : vector<2x16xf32>
    %111 = arith.mulf %109, %92 : vector<2x16xf32>
    %112 = tpu.concatenate %110, %111 in 1 : vector<2x16xf32>, vector<2x16xf32> -> vector<2x32xf32>
    %cst_51 = arith.constant 0.000000e+00 : f32
    %113 = vector.broadcast %cst_51 : f32 to vector<2x32xf32>
    %114 = arith.maximumf %112, %113 : vector<2x32xf32>
    %115 = vector.extract_strided_slice %108 {offsets = [0, 16], sizes = [2, 16], strides = [1, 1]} : vector<2x32xf32> to vector<2x16xf32>
    %c0_52 = arith.constant 0 : index
    %c0_53 = arith.constant 0 : index
    %116 = vector.load %arg3[%c0_52, %c0_53] : memref<32x16xf32, #tpu.memory_space<vmem>>, vector<32x16xf32>
    %cst_54 = arith.constant dense<0.000000e+00> : vector<2x16xf32>
    %117 = tpu.matmul %114, %116, %cst_54 {dimension_numbers = #tpu.dot_dimension_numbers<[1], [0], [0], [1], [0, 0, 1, 1], [], []>} : vector<2x32xf32>, vector<32x16xf32>, vector<2x16xf32> -> vector<2x16xf32>
    %118 = arith.addf %115, %117 : vector<2x16xf32>
    %cst_55 = arith.constant 0.000000e+00 : f32
    %119 = vector.broadcast %cst_55 : f32 to vector<2x16xf32>
    %120 = arith.maximumf %118, %119 : vector<2x16xf32>
    %c14 = arith.constant 14 : index
    %c0_56 = arith.constant 0 : index
    %121 = vector.load %arg7[%c14, %c0_56] : memref<16x16xf32, #tpu.memory_space<vmem>>, vector<2x16xf32>
    tpu.vector_store %arg7[%c14, %c0_56], %120 {strides = array<i32>} : memref<16x16xf32, #tpu.memory_space<vmem>>, vector<2x16xf32>,
    %c0_57 = arith.constant 0 : index
    %c0_58 = arith.constant 0 : index
    %122 = vector.load %arg7[%c0_57, %c0_58] : memref<16x16xf32, #tpu.memory_space<vmem>>, vector<16x16xf32>
    %c0_59 = arith.constant 0 : index
    %c0_60 = arith.constant 0 : index
    %123 = vector.load %arg4[%c0_59, %c0_60] : memref<16x5xf32, #tpu.memory_space<vmem>>, vector<16x5xf32>
    %cst_61 = arith.constant dense<0.000000e+00> : vector<16x5xf32>
    %124 = tpu.matmul %122, %123, %cst_61 {dimension_numbers = #tpu.dot_dimension_numbers<[1], [0], [0], [1], [0, 0, 1, 1], [], []>} : vector<16x16xf32>, vector<16x5xf32>, vector<16x5xf32> -> vector<16x5xf32>
    %c0_62 = arith.constant 0 : index
    %c0_63 = arith.constant 0 : index
    %125 = vector.load %arg5[%c0_62, %c0_63] : memref<1x5xf32, #tpu.memory_space<vmem>>, vector<1x5xf32>
    %126 = vector.broadcast %125 : vector<1x5xf32> to vector<16x5xf32>
    %127 = arith.addf %124, %126 : vector<16x5xf32>
    %cst_64 = arith.constant dense<0xFF800000> : vector<16xf32>
    %128 = vector.multi_reduction <maximumf>, %127, %cst_64 [1] : vector<16x5xf32> to vector<16xf32>
    %129 = vector.shape_cast %128 : vector<16xf32> to vector<16x1xf32>
    %130 = vector.broadcast %129 : vector<16x1xf32> to vector<16x5xf32>
    %131 = arith.subf %127, %130 : vector<16x5xf32>
    %132 = math.exp %131 : vector<16x5xf32>
    %cst_65 = arith.constant dense<0.000000e+00> : vector<16xf32>
    %133 = vector.multi_reduction <add>, %132, %cst_65 [1] : vector<16x5xf32> to vector<16xf32>
    %134 = vector.shape_cast %133 : vector<16xf32> to vector<16x1xf32>
    %135 = math.log %134 : vector<16x1xf32>
    %136 = vector.broadcast %135 : vector<16x1xf32> to vector<16x5xf32>
    %137 = arith.subf %131, %136 : vector<16x5xf32>
    %c0_66 = arith.constant 0 : index
    %c0_67 = arith.constant 0 : index
    %138 = vector.load %arg6[%c0_66, %c0_67] : memref<16x5xf32, #tpu.memory_space<vmem>>, vector<16x5xf32>
    tpu.vector_store %arg6[%c0_66, %c0_67], %137 {strides = array<i32>} : memref<16x5xf32, #tpu.memory_space<vmem>>, vector<16x5xf32>,
    return
  }
}

</mosaic_0001>

<llo_original>
// kernel: tpu_custom_call.1
$region0: #{tpu_custom_call.1}
  #allocation0 [shape = 'u32[]', space=smem, size = 0x4, offset = 0x4, fixed_abs, tag = 'smem constant byte address 0x4 - core index']
  #allocation1 [shape = 'u32[144,128]{1,0:T(1,128)}', space=vmem, size = 0x12000, scoped, tag = 'internal scratch']
  #allocation2 [shape = 'f32[16,16]{1,0:T(8,128)}', space=vmem, size = 0x2000, scoped, tag = 'scratch operand']
  %s0 = inlined_call_operand.vmem [shape: f32[16,16], index: 0, kind: input, shape index: {}]
  %s1 = inlined_call_operand.vmem [shape: f32[16,32], index: 1, kind: input, shape index: {}]
  %s2 = inlined_call_operand.vmem [shape: f32[1,32], index: 2, kind: input, shape index: {}]
  %s3 = inlined_call_operand.vmem [shape: f32[32,16], index: 3, kind: input, shape index: {}]
  %s4 = inlined_call_operand.vmem [shape: f32[16,5], index: 4, kind: input, shape index: {}]
  %s5 = inlined_call_operand.vmem [shape: f32[1,5], index: 5, kind: input, shape index: {}]
  %s6 = inlined_call_operand.vmem [shape: f32[16,5], index: 6, kind: output, shape index: {}]
  %s7 = sld [smem:[#allocation0]]
  $region34: #{tpu_custom_call.1} parent=0
    _
  %s9 = ssub.s32 1, %s7
  %s10 = scalar_select 0, %s9, %s7
  // Predicated region
  $region2: #{tpu_custom_call.1} parent=0 // pred_check
    _
  $region3: #{tpu_custom_call.1} parent=0 // pred_check_branch
    %12 = sbr.rel (0) target = $region5
  $region4: #{tpu_custom_call.1} parent=0 // pred_region
    _
  $region5: #{tpu_custom_call.1} parent=0 // pred_fallthru
    _
  // Predicated region
  $region6: #{tpu_custom_call.1} parent=0 // pred_check
    _
  $region7: #{tpu_custom_call.1} parent=0 // pred_check_branch
    %14 = sbr.rel (0) target = $region9
  $region8: #{tpu_custom_call.1} parent=0 // pred_region
    _
  $region9: #{tpu_custom_call.1} parent=0 // pred_fallthru
    _
  // Predicated region
  $region10: #{tpu_custom_call.1} parent=0 // pred_check
    _
  $region11: #{tpu_custom_call.1} parent=0 // pred_check_branch
    %16 = sbr.rel (0) target = $region13
  $region12: #{tpu_custom_call.1} parent=0 // pred_region
    _
  $region13: #{tpu_custom_call.1} parent=0 // pred_fallthru
    _
  // Predicated region
  $region14: #{tpu_custom_call.1} parent=0 // pred_check
    _
  $region15: #{tpu_custom_call.1} parent=0 // pred_check_branch
    %18 = sbr.rel (0) target = $region17
  $region16: #{tpu_custom_call.1} parent=0 // pred_region
    _
  $region17: #{tpu_custom_call.1} parent=0 // pred_fallthru
    _
  // Predicated region
  $region18: #{tpu_custom_call.1} parent=0 // pred_check
    _
  $region19: #{tpu_custom_call.1} parent=0 // pred_check_branch
    %20 = sbr.rel (0) target = $region21
  $region20: #{tpu_custom_call.1} parent=0 // pred_region
    _
  $region21: #{tpu_custom_call.1} parent=0 // pred_fallthru
    _
  // Predicated region
  $region22: #{tpu_custom_call.1} parent=0 // pred_check
    _
  $region23: #{tpu_custom_call.1} parent=0 // pred_check_branch
    %22 = sbr.rel (0) target = $region25
  $region24: #{tpu_custom_call.1} parent=0 // pred_region
    _
  $region25: #{tpu_custom_call.1} parent=0 // pred_fallthru
    _
  %v23 = vld [vmem:[%s0] sm:$0xff]
  %v24 = vld [vmem:[%s0 + $0x8] sm:$0xff]
  %v25 = vmax.f32 %v23, 0.0
  %v26 = vmax.f32 %v24, 0.0
  %v27 = vld [vmem:[%s1] sm:$0xff]
  %v28 = vld [vmem:[%s1 + $0x8] sm:$0xff]
  %v29 = vld [vmem:[%s2] sm:$0x1]
  %v31 = vlaneseq
  %v32 = vshrl.u32 %v31, 7
  %v33 = vsub.s32 0, %v32
  %v34 = vrot.slane %v29, %v33
  %vm36 = vcmask 130048
  %v38 = vsel %vm36, %v25, 0
  %v41 = vsel %vm36, %v26, 0
  %43 = vmatprep.subr.mxu0 0.0
  %44 = vmatpush1.msra.mxu0 %v27
  %45 = vmatprep.subr.mxu0 0.0
  %46 = vmatpush1.msra.mxu0 %v28
  %47 = vmatprep.subr.mxu0 0.0
  %48 = vmatpush1.msra.mxu0 0.0
  %49 = vmatprep.subr.mxu0 0.0
  %50 = vmatpush1.msra.mxu0 0.0
  %51 = vmatprep.subr.mxu0 0.0
  %52 = vmatpush1.msra.mxu0 0.0
  %53 = vmatprep.subr.mxu0 0.0
  %54 = vmatpush1.msra.mxu0 0.0
  %55 = vmatprep.subr.mxu0 0.0
  %56 = vmatpush1.msra.mxu0 0.0
  %57 = vmatprep.subr.mxu0 0.0
  %58 = vmatpush1.msra.mxu0 0.0
  %59 = vmatprep.subr.mxu0 0.0
  %60 = vmatpush1.msra.mxu0 0.0
  %61 = vmatprep.subr.mxu0 0.0
  %62 = vmatpush1.msra.mxu0 0.0
  %63 = vmatprep.subr.mxu0 0.0
  %64 = vmatpush1.msra.mxu0 0.0
  %65 = vmatprep.subr.mxu0 0.0
  %66 = vmatpush1.msra.mxu0 0.0
  %67 = vmatprep.subr.mxu0 0.0
  %68 = vmatpush1.msra.mxu0 0.0
  %69 = vmatprep.subr.mxu0 0.0
  %70 = vmatpush1.msra.mxu0 0.0
  %71 = vmatprep.subr.mxu0 0.0
  %72 = vmatpush1.msra.mxu0 0.0
  %73 = vmatprep.subr.mxu0 0.0
  %74 = vmatpush1.msra.mxu0 0.0
  %75 = vmatprep.subr.mxu0 0.0
  %76 = vmatpush1.msra.mxu0 0.0
  %77 = vmatprep.subr.mxu0 0.0
  %78 = vmatpush1.msra.mxu0 0.0
  %79 = vmatprep.subr.mxu0 0.0
  %80 = vmatpush1.msra.mxu0 0.0
  %81 = vmatprep.subr.mxu0 0.0
  %82 = vmatpush1.msra.mxu0 0.0
  %83 = vmatprep.subr.mxu0 0.0
  %84 = vmatpush1.msra.mxu0 0.0
  %85 = vmatprep.subr.mxu0 0.0
  %86 = vmatpush1.msra.mxu0 0.0
  %87 = vmatprep.subr.mxu0 0.0
  %88 = vmatpush1.msra.mxu0 0.0
  %89 = vmatprep.subr.mxu0 0.0
  %90 = vmatpush1.msra.mxu0 0.0
  %91 = vmatprep.subr.mxu0 0.0
  %92 = vmatpush1.msra.mxu0 0.0
  %93 = vmatprep.subr.mxu0 0.0
  %94 = vmatpush1.msra.mxu0 0.0
  %95 = vmatprep.subr.mxu0 0.0
  %96 = vmatpush1.msra.mxu0 0.0
  %97 = vmatprep.subr.mxu0 0.0
  %98 = vmatpush1.msra.mxu0 0.0
  %99 = vmatprep.subr.mxu0 0.0
  %100 = vmatpush1.msra.mxu0 0.0
  %101 = vmatprep.subr.mxu0 0.0
  %102 = vmatpush1.msra.mxu0 0.0
  %103 = vmatprep.subr.mxu0 0.0
  %104 = vmatpush1.msra.mxu0 0.0
  %105 = vmatprep.subr.mxu0 0.0
  %106 = vmatpush1.msra.mxu0 0.0
  %107 = vmatprep.mubr.f32.mxu0 0.0
  %108 = vmatmul.mubr.f32.gmra.mrb[0].mxu0 %v38
  %v109 = vpop.f32.mrb[0].mxu0
  %v110 = vadd.f32 %v34, %v109
  %v111 = vpop.f32.mrb[0].mxu0
  %112 = vmatprep.mubr.f32.mxu0 0.0
  %113 = vmatmul.mubr.f32.gmra.mrb[0].mxu0 %v41
  %v114 = vpop.f32.mrb[0].mxu0
  %v115 = vadd.f32 %v34, %v114
  %v116 = vpop.f32.mrb[0].mxu0
  %117 = vdwg.mxu0
  %v118 = vmul.f32 %v110, 0.0
  %120 = vrot.lane.b32.xlu0 %v118, 16
  %v121 = vpop.permute.xlu0 %120
  %v123 = vsel %vm36, %v118, %v121
  %v124 = vmax.f32 %v123, 0.0
  %v125 = vld [vmem:[%s3] sm:$0xff]
  %v126 = vld [vmem:[%s3 + $0x8] sm:$0xff]
  %v127 = vld [vmem:[%s3 + $0x10] sm:$0xff]
  %v128 = vld [vmem:[%s3 + $0x18] sm:$0xff]
  %vm129 = vcmask 261120
  %v131 = vsel %vm129, %v124, 0
  %133 = vmatprep.subr.mxu0 0.0
  %134 = vmatpush1.msra.mxu0 %v125
  %135 = vmatprep.subr.mxu0 0.0
  %136 = vmatpush1.msra.mxu0 %v126
  %137 = vmatprep.subr.mxu0 0.0
  %138 = vmatpush1.msra.mxu0 %v127
  %139 = vmatprep.subr.mxu0 0.0
  %140 = vmatpush1.msra.mxu0 %v128
  %141 = vmatprep.subr.mxu0 0.0
  %142 = vmatpush1.msra.mxu0 0.0
  %143 = vmatprep.subr.mxu0 0.0
  %144 = vmatpush1.msra.mxu0 0.0
  %145 = vmatprep.subr.mxu0 0.0
  %146 = vmatpush1.msra.mxu0 0.0
  %147 = vmatprep.subr.mxu0 0.0
  %148 = vmatpush1.msra.mxu0 0.0
  %149 = vmatprep.subr.mxu0 0.0
  %150 = vmatpush1.msra.mxu0 0.0
  %151 = vmatprep.subr.mxu0 0.0
  %152 = vmatpush1.msra.mxu0 0.0
  %153 = vmatprep.subr.mxu0 0.0
  %154 = vmatpush1.msra.mxu0 0.0
  %155 = vmatprep.subr.mxu0 0.0
  %156 = vmatpush1.msra.mxu0 0.0
  %157 = vmatprep.subr.mxu0 0.0
  %158 = vmatpush1.msra.mxu0 0.0
  %159 = vmatprep.subr.mxu0 0.0
  %160 = vmatpush1.msra.mxu0 0.0
  %161 = vmatprep.subr.mxu0 0.0
  %162 = vmatpush1.msra.mxu0 0.0
  %163 = vmatprep.subr.mxu0 0.0
  %164 = vmatpush1.msra.mxu0 0.0
  %165 = vmatprep.subr.mxu0 0.0
  %166 = vmatpush1.msra.mxu0 0.0
  %167 = vmatprep.subr.mxu0 0.0
  %168 = vmatpush1.msra.mxu0 0.0
  %169 = vmatprep.subr.mxu0 0.0
  %170 = vmatpush1.msra.mxu0 0.0
  %171 = vmatprep.subr.mxu0 0.0
  %172 = vmatpush1.msra.mxu0 0.0
  %173 = vmatprep.subr.mxu0 0.0
  %174 = vmatpush1.msra.mxu0 0.0
  %175 = vmatprep.subr.mxu0 0.0
  %176 = vmatpush1.msra.mxu0 0.0
  %177 = vmatprep.subr.mxu0 0.0
  %178 = vmatpush1.msra.mxu0 0.0
  %179 = vmatprep.subr.mxu0 0.0
  %180 = vmatpush1.msra.mxu0 0.0
  %181 = vmatprep.subr.mxu0 0.0
  %182 = vmatpush1.msra.mxu0 0.0
  %183 = vmatprep.subr.mxu0 0.0
  %184 = vmatpush1.msra.mxu0 0.0
  %185 = vmatprep.subr.mxu0 0.0
  %186 = vmatpush1.msra.mxu0 0.0
  %187 = vmatprep.subr.mxu0 0.0
  %188 = vmatpush1.msra.mxu0 0.0
  %189 = vmatprep.subr.mxu0 0.0
  %190 = vmatpush1.msra.mxu0 0.0
  %191 = vmatprep.subr.mxu0 0.0
  %192 = vmatpush1.msra.mxu0 0.0
  %193 = vmatprep.subr.mxu0 0.0
  %194 = vmatpush1.msra.mxu0 0.0
  %195 = vmatprep.subr.mxu0 0.0
  %196 = vmatpush1.msra.mxu0 0.0
  %197 = vmatprep.mubr.f32.mxu0 0.0
  %198 = vmatmul.mubr.f32.gmra.mrb[0].mxu0 %v131
  %v199 = vpop.f32.mrb[0].mxu0
  %v200 = vadd.f32 0.0, %v199
  %v201 = vpop.f32.mrb[0].mxu0
  %202 = vdwg.mxu0
  %204 = vrot.lane.b32.xlu0 %v200, 16
  %v205 = vpop.permute.xlu0 %204
  %v207 = vadd.f32 %v110, %v205
  %v208 = vmax.f32 %v207, 0.0
  %210 = vrot.lane.b32.xlu0 %v208, 112
  %v211 = vpop.permute.xlu0 %210
  %vm213 = vcmask 123904
  %214 = vst.msk [vmem:[#allocation2] sm:$0x3] %vm213, %v211
  %v215 = vrot.slane %v208, 6
  %216 = vrot.lane.b32.xlu0 %v215, 112
  %v217 = vpop.permute.xlu0 %216
  %v219 = vmul.f32 %v110, %v217
  %v220 = vsel %vm36, %v219, %v121
  %v221 = vmax.f32 %v220, 0.0
  %v222 = vld [vmem:[%s3] sm:$0xff]
  %v223 = vld [vmem:[%s3 + $0x8] sm:$0xff]
  %v224 = vld [vmem:[%s3 + $0x10] sm:$0xff]
  %v225 = vld [vmem:[%s3 + $0x18] sm:$0xff]
  %v227 = vrot.slane %v221, 2
  %v228 = vsel %vm129, %v227, 0
  %230 = vmatprep.subr.mxu0 0.0
  %231 = vmatpush1.msra.mxu0 %v222
  %232 = vmatprep.subr.mxu0 0.0
  %233 = vmatpush1.msra.mxu0 %v223
  %234 = vmatprep.subr.mxu0 0.0
  %235 = vmatpush1.msra.mxu0 %v224
  %236 = vmatprep.subr.mxu0 0.0
  %237 = vmatpush1.msra.mxu0 %v225
  %238 = vmatprep.subr.mxu0 0.0
  %239 = vmatpush1.msra.mxu0 0.0
  %240 = vmatprep.subr.mxu0 0.0
  %241 = vmatpush1.msra.mxu0 0.0
  %242 = vmatprep.subr.mxu0 0.0
  %243 = vmatpush1.msra.mxu0 0.0
  %244 = vmatprep.subr.mxu0 0.0
  %245 = vmatpush1.msra.mxu0 0.0
  %246 = vmatprep.subr.mxu0 0.0
  %247 = vmatpush1.msra.mxu0 0.0
  %248 = vmatprep.subr.mxu0 0.0
  %249 = vmatpush1.msra.mxu0 0.0
  %250 = vmatprep.subr.mxu0 0.0
  %251 = vmatpush1.msra.mxu0 0.0
  %252 = vmatprep.subr.mxu0 0.0
  %253 = vmatpush1.msra.mxu0 0.0
  %254 = vmatprep.subr.mxu0 0.0
  %255 = vmatpush1.msra.mxu0 0.0
  %256 = vmatprep.subr.mxu0 0.0
  %257 = vmatpush1.msra.mxu0 0.0
  %258 = vmatprep.subr.mxu0 0.0
  %259 = vmatpush1.msra.mxu0 0.0
  %260 = vmatprep.subr.mxu0 0.0
  %261 = vmatpush1.msra.mxu0 0.0
  %262 = vmatprep.subr.mxu0 0.0
  %263 = vmatpush1.msra.mxu0 0.0
  %264 = vmatprep.subr.mxu0 0.0
  %265 = vmatpush1.msra.mxu0 0.0
  %266 = vmatprep.subr.mxu0 0.0
  %267 = vmatpush1.msra.mxu0 0.0
  %268 = vmatprep.subr.mxu0 0.0
  %269 = vmatpush1.msra.mxu0 0.0
  %270 = vmatprep.subr.mxu0 0.0
  %271 = vmatpush1.msra.mxu0 0.0
  %272 = vmatprep.subr.mxu0 0.0
  %273 = vmatpush1.msra.mxu0 0.0
  %274 = vmatprep.subr.mxu0 0.0
  %275 = vmatpush1.msra.mxu0 0.0
  %276 = vmatprep.subr.mxu0 0.0
  %277 = vmatpush1.msra.mxu0 0.0
  %278 = vmatprep.subr.mxu0 0.0
  %279 = vmatpush1.msra.mxu0 0.0
  %280 = vmatprep.subr.mxu0 0.0
  %281 = vmatpush1.msra.mxu0 0.0
  %282 = vmatprep.subr.mxu0 0.0
  %283 = vmatpush1.msra.mxu0 0.0
  %284 = vmatprep.subr.mxu0 0.0
  %285 = vmatpush1.msra.mxu0 0.0
  %286 = vmatprep.subr.mxu0 0.0
  %287 = vmatpush1.msra.mxu0 0.0
  %288 = vmatprep.subr.mxu0 0.0
  %289 = vmatpush1.msra.mxu0 0.0
  %290 = vmatprep.subr.mxu0 0.0
  %291 = vmatpush1.msra.mxu0 0.0
  %292 = vmatprep.subr.mxu0 0.0
  %293 = vmatpush1.msra.mxu0 0.0
  %294 = vmatprep.mubr.f32.mxu0 0.0
  %295 = vmatmul.mubr.f32.gmra.mrb[0].mxu0 %v228
  %v296 = vpop.f32.mrb[0].mxu0
  %v297 = vadd.f32 0.0, %v296
  %v298 = vpop.f32.mrb[0].mxu0
  %299 = vdwg.mxu0
  %v301 = vrot.slane %v297, 6
  %302 = vrot.lane.b32.xlu0 %v301, 16
  %v303 = vpop.permute.xlu0 %302
  %v305 = vadd.f32 %v110, %v303
  %v306 = vmax.f32 %v305, 0.0
  %308 = vrot.lane.b32.xlu0 %v306, 112
  %v309 = vpop.permute.xlu0 %308
  %vm311 = vcmask 125954
  %312 = vst.msk [vmem:[#allocation2] sm:$0xc] %vm311, %v309
  %v313 = vrot.slane %v306, 6
  %314 = vrot.lane.b32.xlu0 %v313, 112
  %v315 = vpop.permute.xlu0 %314
  %v317 = vmul.f32 %v110, %v315
  %v318 = vrot.slane %v208, 4
  %319 = vrot.lane.b32.xlu0 %v318, 112
  %v320 = vpop.permute.xlu0 %319
  %v322 = vmul.f32 %v110, %v320
  %324 = vrot.lane.b32.xlu0 %v322, 16
  %v325 = vpop.permute.xlu0 %324
  %v327 = vsel %vm36, %v317, %v325
  %v328 = vmax.f32 %v327, 0.0
  %v329 = vld [vmem:[%s3] sm:$0xff]
  %v330 = vld [vmem:[%s3 + $0x8] sm:$0xff]
  %v331 = vld [vmem:[%s3 + $0x10] sm:$0xff]
  %v332 = vld [vmem:[%s3 + $0x18] sm:$0xff]
  %v334 = vrot.slane %v328, 4
  %v335 = vsel %vm129, %v334, 0
  %337 = vmatprep.subr.mxu0 0.0
  %338 = vmatpush1.msra.mxu0 %v329
  %339 = vmatprep.subr.mxu0 0.0
  %340 = vmatpush1.msra.mxu0 %v330
  %341 = vmatprep.subr.mxu0 0.0
  %342 = vmatpush1.msra.mxu0 %v331
  %343 = vmatprep.subr.mxu0 0.0
  %344 = vmatpush1.msra.mxu0 %v332
  %345 = vmatprep.subr.mxu0 0.0
  %346 = vmatpush1.msra.mxu0 0.0
  %347 = vmatprep.subr.mxu0 0.0
  %348 = vmatpush1.msra.mxu0 0.0
  %349 = vmatprep.subr.mxu0 0.0
  %350 = vmatpush1.msra.mxu0 0.0
  %351 = vmatprep.subr.mxu0 0.0
  %352 = vmatpush1.msra.mxu0 0.0
  %353 = vmatprep.subr.mxu0 0.0
  %354 = vmatpush1.msra.mxu0 0.0
  %355 = vmatprep.subr.mxu0 0.0
  %356 = vmatpush1.msra.mxu0 0.0
  %357 = vmatprep.subr.mxu0 0.0
  %358 = vmatpush1.msra.mxu0 0.0
  %359 = vmatprep.subr.mxu0 0.0
  %360 = vmatpush1.msra.mxu0 0.0
  %361 = vmatprep.subr.mxu0 0.0
  %362 = vmatpush1.msra.mxu0 0.0
  %363 = vmatprep.subr.mxu0 0.0
  %364 = vmatpush1.msra.mxu0 0.0
  %365 = vmatprep.subr.mxu0 0.0
  %366 = vmatpush1.msra.mxu0 0.0
  %367 = vmatprep.subr.mxu0 0.0
  %368 = vmatpush1.msra.mxu0 0.0
  %369 = vmatprep.subr.mxu0 0.0
  %370 = vmatpush1.msra.mxu0 0.0
  %371 = vmatprep.subr.mxu0 0.0
  %372 = vmatpush1.msra.mxu0 0.0
  %373 = vmatprep.subr.mxu0 0.0
  %374 = vmatpush1.msra.mxu0 0.0
  %375 = vmatprep.subr.mxu0 0.0
  %376 = vmatpush1.msra.mxu0 0.0
  %377 = vmatprep.subr.mxu0 0.0
  %378 = vmatpush1.msra.mxu0 0.0
  %379 = vmatprep.subr.mxu0 0.0
  %380 = vmatpush1.msra.mxu0 0.0
  %381 = vmatprep.subr.mxu0 0.0
  %382 = vmatpush1.msra.mxu0 0.0
  %383 = vmatprep.subr.mxu0 0.0
  %384 = vmatpush1.msra.mxu0 0.0
  %385 = vmatprep.subr.mxu0 0.0
  %386 = vmatpush1.msra.mxu0 0.0
  %387 = vmatprep.subr.mxu0 0.0
  %388 = vmatpush1.msra.mxu0 0.0
  %389 = vmatprep.subr.mxu0 0.0
  %390 = vmatpush1.msra.mxu0 0.0
  %391 = vmatprep.subr.mxu0 0.0
  %392 = vmatpush1.msra.mxu0 0.0
  %393 = vmatprep.subr.mxu0 0.0
  %394 = vmatpush1.msra.mxu0 0.0
  %395 = vmatprep.subr.mxu0 0.0
  %396 = vmatpush1.msra.mxu0 0.0
  %397 = vmatprep.subr.mxu0 0.0
  %398 = vmatpush1.msra.mxu0 0.0
  %399 = vmatprep.subr.mxu0 0.0
  %400 = vmatpush1.msra.mxu0 0.0
  %401 = vmatprep.mubr.f32.mxu0 0.0
  %402 = vmatmul.mubr.f32.gmra.mrb[0].mxu0 %v335
  %v403 = vpop.f32.mrb[0].mxu0
  %v404 = vadd.f32 0.0, %v403
  %v405 = vpop.f32.mrb[0].mxu0
  %406 = vdwg.mxu0
  %v408 = vrot.slane %v404, 4
  %409 = vrot.lane.b32.xlu0 %v408, 16
  %v410 = vpop.permute.xlu0 %409
  %v412 = vadd.f32 %v110, %v410
  %v413 = vmax.f32 %v412, 0.0
  %415 = vrot.lane.b32.xlu0 %v413, 112
  %v416 = vpop.permute.xlu0 %415
  %vm418 = vcmask 128004
  %419 = vst.msk [vmem:[#allocation2] sm:$0x30] %vm418, %v416
  %v420 = vrot.slane %v413, 6
  %421 = vrot.lane.b32.xlu0 %v420, 112
  %v422 = vpop.permute.xlu0 %421
  %v424 = vmul.f32 %v110, %v422
  %v425 = vrot.slane %v306, 4
  %426 = vrot.lane.b32.xlu0 %v425, 112
  %v427 = vpop.permute.xlu0 %426
  %v429 = vmul.f32 %v110, %v427
  %431 = vrot.lane.b32.xlu0 %v429, 16
  %v432 = vpop.permute.xlu0 %431
  %v434 = vsel %vm36, %v424, %v432
  %v435 = vmax.f32 %v434, 0.0
  %v436 = vld [vmem:[%s3] sm:$0xff]
  %v437 = vld [vmem:[%s3 + $0x8] sm:$0xff]
  %v438 = vld [vmem:[%s3 + $0x10] sm:$0xff]
  %v439 = vld [vmem:[%s3 + $0x18] sm:$0xff]
  %v441 = vrot.slane %v435, 6
  %v442 = vsel %vm129, %v441, 0
  %444 = vmatprep.subr.mxu0 0.0
  %445 = vmatpush1.msra.mxu0 %v436
  %446 = vmatprep.subr.mxu0 0.0
  %447 = vmatpush1.msra.mxu0 %v437
  %448 = vmatprep.subr.mxu0 0.0
  %449 = vmatpush1.msra.mxu0 %v438
  %450 = vmatprep.subr.mxu0 0.0
  %451 = vmatpush1.msra.mxu0 %v439
  %452 = vmatprep.subr.mxu0 0.0
  %453 = vmatpush1.msra.mxu0 0.0
  %454 = vmatprep.subr.mxu0 0.0
  %455 = vmatpush1.msra.mxu0 0.0
  %456 = vmatprep.subr.mxu0 0.0
  %457 = vmatpush1.msra.mxu0 0.0
  %458 = vmatprep.subr.mxu0 0.0
  %459 = vmatpush1.msra.mxu0 0.0
  %460 = vmatprep.subr.mxu0 0.0
  %461 = vmatpush1.msra.mxu0 0.0
  %462 = vmatprep.subr.mxu0 0.0
  %463 = vmatpush1.msra.mxu0 0.0
  %464 = vmatprep.subr.mxu0 0.0
  %465 = vmatpush1.msra.mxu0 0.0
  %466 = vmatprep.subr.mxu0 0.0
  %467 = vmatpush1.msra.mxu0 0.0
  %468 = vmatprep.subr.mxu0 0.0
  %469 = vmatpush1.msra.mxu0 0.0
  %470 = vmatprep.subr.mxu0 0.0
  %471 = vmatpush1.msra.mxu0 0.0
  %472 = vmatprep.subr.mxu0 0.0
  %473 = vmatpush1.msra.mxu0 0.0
  %474 = vmatprep.subr.mxu0 0.0
  %475 = vmatpush1.msra.mxu0 0.0
  %476 = vmatprep.subr.mxu0 0.0
  %477 = vmatpush1.msra.mxu0 0.0
  %478 = vmatprep.subr.mxu0 0.0
  %479 = vmatpush1.msra.mxu0 0.0
  %480 = vmatprep.subr.mxu0 0.0
  %481 = vmatpush1.msra.mxu0 0.0
  %482 = vmatprep.subr.mxu0 0.0
  %483 = vmatpush1.msra.mxu0 0.0
  %484 = vmatprep.subr.mxu0 0.0
  %485 = vmatpush1.msra.mxu0 0.0
  %486 = vmatprep.subr.mxu0 0.0
  %487 = vmatpush1.msra.mxu0 0.0
  %488 = vmatprep.subr.mxu0 0.0
  %489 = vmatpush1.msra.mxu0 0.0
  %490 = vmatprep.subr.mxu0 0.0
  %491 = vmatpush1.msra.mxu0 0.0
  %492 = vmatprep.subr.mxu0 0.0
  %493 = vmatpush1.msra.mxu0 0.0
  %494 = vmatprep.subr.mxu0 0.0
  %495 = vmatpush1.msra.mxu0 0.0
  %496 = vmatprep.subr.mxu0 0.0
  %497 = vmatpush1.msra.mxu0 0.0
  %498 = vmatprep.subr.mxu0 0.0
  %499 = vmatpush1.msra.mxu0 0.0
  %500 = vmatprep.subr.mxu0 0.0
  %501 = vmatpush1.msra.mxu0 0.0
  %502 = vmatprep.subr.mxu0 0.0
  %503 = vmatpush1.msra.mxu0 0.0
  %504 = vmatprep.subr.mxu0 0.0
  %505 = vmatpush1.msra.mxu0 0.0
  %506 = vmatprep.subr.mxu0 0.0
  %507 = vmatpush1.msra.mxu0 0.0
  %508 = vmatprep.mubr.f32.mxu0 0.0
  %509 = vmatmul.mubr.f32.gmra.mrb[0].mxu0 %v442
  %v510 = vpop.f32.mrb[0].mxu0
  %v511 = vadd.f32 0.0, %v510
  %v512 = vpop.f32.mrb[0].mxu0
  %513 = vdwg.mxu0
  %v515 = vrot.slane %v511, 2
  %516 = vrot.lane.b32.xlu0 %v515, 16
  %v517 = vpop.permute.xlu0 %516
  %v519 = vadd.f32 %v110, %v517
  %v520 = vmax.f32 %v519, 0.0
  %522 = vrot.lane.b32.xlu0 %v520, 112
  %v523 = vpop.permute.xlu0 %522
  %vm525 = vcmask 130054
  %526 = vst.msk [vmem:[#allocation2] sm:$0xc0] %vm525, %v523
  %v527 = vrot.slane %v520, 6
  %528 = vrot.lane.b32.xlu0 %v527, 112
  %v529 = vpop.permute.xlu0 %528
  %v531 = vmul.f32 %v115, %v529
  %v532 = vrot.slane %v413, 4
  %533 = vrot.lane.b32.xlu0 %v532, 112
  %v534 = vpop.permute.xlu0 %533
  %v536 = vmul.f32 %v115, %v534
  %538 = vrot.lane.b32.xlu0 %v536, 16
  %v539 = vpop.permute.xlu0 %538
  %v541 = vsel %vm36, %v531, %v539
  %v542 = vmax.f32 %v541, 0.0
  %v543 = vld [vmem:[%s3] sm:$0xff]
  %v544 = vld [vmem:[%s3 + $0x8] sm:$0xff]
  %v545 = vld [vmem:[%s3 + $0x10] sm:$0xff]
  %v546 = vld [vmem:[%s3 + $0x18] sm:$0xff]
  %v548 = vsel %vm129, %v542, 0
  %550 = vmatprep.subr.mxu0 0.0
  %551 = vmatpush1.msra.mxu0 %v543
  %552 = vmatprep.subr.mxu0 0.0
  %553 = vmatpush1.msra.mxu0 %v544
  %554 = vmatprep.subr.mxu0 0.0
  %555 = vmatpush1.msra.mxu0 %v545
  %556 = vmatprep.subr.mxu0 0.0
  %557 = vmatpush1.msra.mxu0 %v546
  %558 = vmatprep.subr.mxu0 0.0
  %559 = vmatpush1.msra.mxu0 0.0
  %560 = vmatprep.subr.mxu0 0.0
  %561 = vmatpush1.msra.mxu0 0.0
  %562 = vmatprep.subr.mxu0 0.0
  %563 = vmatpush1.msra.mxu0 0.0
  %564 = vmatprep.subr.mxu0 0.0
  %565 = vmatpush1.msra.mxu0 0.0
  %566 = vmatprep.subr.mxu0 0.0
  %567 = vmatpush1.msra.mxu0 0.0
  %568 = vmatprep.subr.mxu0 0.0
  %569 = vmatpush1.msra.mxu0 0.0
  %570 = vmatprep.subr.mxu0 0.0
  %571 = vmatpush1.msra.mxu0 0.0
  %572 = vmatprep.subr.mxu0 0.0
  %573 = vmatpush1.msra.mxu0 0.0
  %574 = vmatprep.subr.mxu0 0.0
  %575 = vmatpush1.msra.mxu0 0.0
  %576 = vmatprep.subr.mxu0 0.0
  %577 = vmatpush1.msra.mxu0 0.0
  %578 = vmatprep.subr.mxu0 0.0
  %579 = vmatpush1.msra.mxu0 0.0
  %580 = vmatprep.subr.mxu0 0.0
  %581 = vmatpush1.msra.mxu0 0.0
  %582 = vmatprep.subr.mxu0 0.0
  %583 = vmatpush1.msra.mxu0 0.0
  %584 = vmatprep.subr.mxu0 0.0
  %585 = vmatpush1.msra.mxu0 0.0
  %586 = vmatprep.subr.mxu0 0.0
  %587 = vmatpush1.msra.mxu0 0.0
  %588 = vmatprep.subr.mxu0 0.0
  %589 = vmatpush1.msra.mxu0 0.0
  %590 = vmatprep.subr.mxu0 0.0
  %591 = vmatpush1.msra.mxu0 0.0
  %592 = vmatprep.subr.mxu0 0.0
  %593 = vmatpush1.msra.mxu0 0.0
  %594 = vmatprep.subr.mxu0 0.0
  %595 = vmatpush1.msra.mxu0 0.0
  %596 = vmatprep.subr.mxu0 0.0
  %597 = vmatpush1.msra.mxu0 0.0
  %598 = vmatprep.subr.mxu0 0.0
  %599 = vmatpush1.msra.mxu0 0.0
  %600 = vmatprep.subr.mxu0 0.0
  %601 = vmatpush1.msra.mxu0 0.0
  %602 = vmatprep.subr.mxu0 0.0
  %603 = vmatpush1.msra.mxu0 0.0
  %604 = vmatprep.subr.mxu0 0.0
  %605 = vmatpush1.msra.mxu0 0.0
  %606 = vmatprep.subr.mxu0 0.0
  %607 = vmatpush1.msra.mxu0 0.0
  %608 = vmatprep.subr.mxu0 0.0
  %609 = vmatpush1.msra.mxu0 0.0
  %610 = vmatprep.subr.mxu0 0.0
  %611 = vmatpush1.msra.mxu0 0.0
  %612 = vmatprep.subr.mxu0 0.0
  %613 = vmatpush1.msra.mxu0 0.0
  %614 = vmatprep.mubr.f32.mxu0 0.0
  %615 = vmatmul.mubr.f32.gmra.mrb[0].mxu0 %v548
  %v616 = vpop.f32.mrb[0].mxu0
  %v617 = vadd.f32 0.0, %v616
  %v618 = vpop.f32.mrb[0].mxu0
  %619 = vdwg.mxu0
  %621 = vrot.lane.b32.xlu0 %v617, 16
  %v622 = vpop.permute.xlu0 %621
  %v624 = vadd.f32 %v115, %v622
  %v625 = vmax.f32 %v624, 0.0
  %627 = vrot.lane.b32.xlu0 %v625, 112
  %v628 = vpop.permute.xlu0 %627
  %630 = vst.msk [vmem:[#allocation2 + $0x8] sm:$0x3] %vm213, %v628
  %v631 = vrot.slane %v625, 6
  %632 = vrot.lane.b32.xlu0 %v631, 112
  %v633 = vpop.permute.xlu0 %632
  %v635 = vmul.f32 %v115, %v633
  %v636 = vrot.slane %v520, 4
  %637 = vrot.lane.b32.xlu0 %v636, 112
  %v638 = vpop.permute.xlu0 %637
  %v640 = vmul.f32 %v115, %v638
  %642 = vrot.lane.b32.xlu0 %v640, 16
  %v643 = vpop.permute.xlu0 %642
  %v645 = vsel %vm36, %v635, %v643
  %v646 = vmax.f32 %v645, 0.0
  %v647 = vld [vmem:[%s3] sm:$0xff]
  %v648 = vld [vmem:[%s3 + $0x8] sm:$0xff]
  %v649 = vld [vmem:[%s3 + $0x10] sm:$0xff]
  %v650 = vld [vmem:[%s3 + $0x18] sm:$0xff]
  %v652 = vrot.slane %v646, 2
  %v653 = vsel %vm129, %v652, 0
  %655 = vmatprep.subr.mxu0 0.0
  %656 = vmatpush1.msra.mxu0 %v647
  %657 = vmatprep.subr.mxu0 0.0
  %658 = vmatpush1.msra.mxu0 %v648
  %659 = vmatprep.subr.mxu0 0.0
  %660 = vmatpush1.msra.mxu0 %v649
  %661 = vmatprep.subr.mxu0 0.0
  %662 = vmatpush1.msra.mxu0 %v650
  %663 = vmatprep.subr.mxu0 0.0
  %664 = vmatpush1.msra.mxu0 0.0
  %665 = vmatprep.subr.mxu0 0.0
  %666 = vmatpush1.msra.mxu0 0.0
  %667 = vmatprep.subr.mxu0 0.0
  %668 = vmatpush1.msra.mxu0 0.0
  %669 = vmatprep.subr.mxu0 0.0
  %670 = vmatpush1.msra.mxu0 0.0
  %671 = vmatprep.subr.mxu0 0.0
  %672 = vmatpush1.msra.mxu0 0.0
  %673 = vmatprep.subr.mxu0 0.0
  %674 = vmatpush1.msra.mxu0 0.0
  %675 = vmatprep.subr.mxu0 0.0
  %676 = vmatpush1.msra.mxu0 0.0
  %677 = vmatprep.subr.mxu0 0.0
  %678 = vmatpush1.msra.mxu0 0.0
  %679 = vmatprep.subr.mxu0 0.0
  %680 = vmatpush1.msra.mxu0 0.0
  %681 = vmatprep.subr.mxu0 0.0
  %682 = vmatpush1.msra.mxu0 0.0
  %683 = vmatprep.subr.mxu0 0.0
  %684 = vmatpush1.msra.mxu0 0.0
  %685 = vmatprep.subr.mxu0 0.0
  %686 = vmatpush1.msra.mxu0 0.0
  %687 = vmatprep.subr.mxu0 0.0
  %688 = vmatpush1.msra.mxu0 0.0
  %689 = vmatprep.subr.mxu0 0.0
  %690 = vmatpush1.msra.mxu0 0.0
  %691 = vmatprep.subr.mxu0 0.0
  %692 = vmatpush1.msra.mxu0 0.0
  %693 = vmatprep.subr.mxu0 0.0
  %694 = vmatpush1.msra.mxu0 0.0
  %695 = vmatprep.subr.mxu0 0.0
  %696 = vmatpush1.msra.mxu0 0.0
  %697 = vmatprep.subr.mxu0 0.0
  %698 = vmatpush1.msra.mxu0 0.0
  %699 = vmatprep.subr.mxu0 0.0
  %700 = vmatpush1.msra.mxu0 0.0
  %701 = vmatprep.subr.mxu0 0.0
  %702 = vmatpush1.msra.mxu0 0.0
  %703 = vmatprep.subr.mxu0 0.0
  %704 = vmatpush1.msra.mxu0 0.0
  %705 = vmatprep.subr.mxu0 0.0
  %706 = vmatpush1.msra.mxu0 0.0
  %707 = vmatprep.subr.mxu0 0.0
  %708 = vmatpush1.msra.mxu0 0.0
  %709 = vmatprep.subr.mxu0 0.0
  %710 = vmatpush1.msra.mxu0 0.0
  %711 = vmatprep.subr.mxu0 0.0
  %712 = vmatpush1.msra.mxu0 0.0
  %713 = vmatprep.subr.mxu0 0.0
  %714 = vmatpush1.msra.mxu0 0.0
  %715 = vmatprep.subr.mxu0 0.0
  %716 = vmatpush1.msra.mxu0 0.0
  %717 = vmatprep.subr.mxu0 0.0
  %718 = vmatpush1.msra.mxu0 0.0
  %719 = vmatprep.mubr.f32.mxu0 0.0
  %720 = vmatmul.mubr.f32.gmra.mrb[0].mxu0 %v653
  %v721 = vpop.f32.mrb[0].mxu0
  %v722 = vadd.f32 0.0, %v721
  %v723 = vpop.f32.mrb[0].mxu0
  %724 = vdwg.mxu0
  %v726 = vrot.slane %v722, 6
  %727 = vrot.lane.b32.xlu0 %v726, 16
  %v728 = vpop.permute.xlu0 %727
  %v730 = vadd.f32 %v115, %v728
  %v731 = vmax.f32 %v730, 0.0
  %733 = vrot.lane.b32.xlu0 %v731, 112
  %v734 = vpop.permute.xlu0 %733
  %736 = vst.msk [vmem:[#allocation2 + $0x8] sm:$0xc] %vm311, %v734
  %v737 = vrot.slane %v731, 6
  %738 = vrot.lane.b32.xlu0 %v737, 112
  %v739 = vpop.permute.xlu0 %738
  %v741 = vmul.f32 %v115, %v739
  %v742 = vrot.slane %v625, 4
  %743 = vrot.lane.b32.xlu0 %v742, 112
  %v744 = vpop.permute.xlu0 %743
  %v746 = vmul.f32 %v115, %v744
  %748 = vrot.lane.b32.xlu0 %v746, 16
  %v749 = vpop.permute.xlu0 %748
  %v751 = vsel %vm36, %v741, %v749
  %v752 = vmax.f32 %v751, 0.0
  %v753 = vld [vmem:[%s3] sm:$0xff]
  %v754 = vld [vmem:[%s3 + $0x8] sm:$0xff]
  %v755 = vld [vmem:[%s3 + $0x10] sm:$0xff]
  %v756 = vld [vmem:[%s3 + $0x18] sm:$0xff]
  %v758 = vrot.slane %v752, 4
  %v759 = vsel %vm129, %v758, 0
  %761 = vmatprep.subr.mxu0 0.0
  %762 = vmatpush1.msra.mxu0 %v753
  %763 = vmatprep.subr.mxu0 0.0
  %764 = vmatpush1.msra.mxu0 %v754
  %765 = vmatprep.subr.mxu0 0.0
  %766 = vmatpush1.msra.mxu0 %v755
  %767 = vmatprep.subr.mxu0 0.0
  %768 = vmatpush1.msra.mxu0 %v756
  %769 = vmatprep.subr.mxu0 0.0
  %770 = vmatpush1.msra.mxu0 0.0
  %771 = vmatprep.subr.mxu0 0.0
  %772 = vmatpush1.msra.mxu0 0.0
  %773 = vmatprep.subr.mxu0 0.0
  %774 = vmatpush1.msra.mxu0 0.0
  %775 = vmatprep.subr.mxu0 0.0
  %776 = vmatpush1.msra.mxu0 0.0
  %777 = vmatprep.subr.mxu0 0.0
  %778 = vmatpush1.msra.mxu0 0.0
  %779 = vmatprep.subr.mxu0 0.0
  %780 = vmatpush1.msra.mxu0 0.0
  %781 = vmatprep.subr.mxu0 0.0
  %782 = vmatpush1.msra.mxu0 0.0
  %783 = vmatprep.subr.mxu0 0.0
  %784 = vmatpush1.msra.mxu0 0.0
  %785 = vmatprep.subr.mxu0 0.0
  %786 = vmatpush1.msra.mxu0 0.0
  %787 = vmatprep.subr.mxu0 0.0
  %788 = vmatpush1.msra.mxu0 0.0
  %789 = vmatprep.subr.mxu0 0.0
  %790 = vmatpush1.msra.mxu0 0.0
  %791 = vmatprep.subr.mxu0 0.0
  %792 = vmatpush1.msra.mxu0 0.0
  %793 = vmatprep.subr.mxu0 0.0
  %794 = vmatpush1.msra.mxu0 0.0
  %795 = vmatprep.subr.mxu0 0.0
  %796 = vmatpush1.msra.mxu0 0.0
  %797 = vmatprep.subr.mxu0 0.0
  %798 = vmatpush1.msra.mxu0 0.0
  %799 = vmatprep.subr.mxu0 0.0
  %800 = vmatpush1.msra.mxu0 0.0
  %801 = vmatprep.subr.mxu0 0.0
  %802 = vmatpush1.msra.mxu0 0.0
  %803 = vmatprep.subr.mxu0 0.0
  %804 = vmatpush1.msra.mxu0 0.0
  %805 = vmatprep.subr.mxu0 0.0
  %806 = vmatpush1.msra.mxu0 0.0
  %807 = vmatprep.subr.mxu0 0.0
  %808 = vmatpush1.msra.mxu0 0.0
  %809 = vmatprep.subr.mxu0 0.0
  %810 = vmatpush1.msra.mxu0 0.0
  %811 = vmatprep.subr.mxu0 0.0
  %812 = vmatpush1.msra.mxu0 0.0
  %813 = vmatprep.subr.mxu0 0.0
  %814 = vmatpush1.msra.mxu0 0.0
  %815 = vmatprep.subr.mxu0 0.0
  %816 = vmatpush1.msra.mxu0 0.0
  %817 = vmatprep.subr.mxu0 0.0
  %818 = vmatpush1.msra.mxu0 0.0
  %819 = vmatprep.subr.mxu0 0.0
  %820 = vmatpush1.msra.mxu0 0.0
  %821 = vmatprep.subr.mxu0 0.0
  %822 = vmatpush1.msra.mxu0 0.0
  %823 = vmatprep.subr.mxu0 0.0
  %824 = vmatpush1.msra.mxu0 0.0
  %825 = vmatprep.mubr.f32.mxu0 0.0
  %826 = vmatmul.mubr.f32.gmra.mrb[0].mxu0 %v759
  %v827 = vpop.f32.mrb[0].mxu0
  %v828 = vadd.f32 0.0, %v827
  %v829 = vpop.f32.mrb[0].mxu0
  %830 = vdwg.mxu0
  %v832 = vrot.slane %v828, 4
  %833 = vrot.lane.b32.xlu0 %v832, 16
  %v834 = vpop.permute.xlu0 %833
  %v836 = vadd.f32 %v115, %v834
  %v837 = vmax.f32 %v836, 0.0
  %839 = vrot.lane.b32.xlu0 %v837, 112
  %v840 = vpop.permute.xlu0 %839
  %842 = vst.msk [vmem:[#allocation2 + $0x8] sm:$0x30] %vm418, %v840
  %v843 = vrot.slane %v837, 6
  %844 = vrot.lane.b32.xlu0 %v843, 112
  %v845 = vpop.permute.xlu0 %844
  %v847 = vmul.f32 %v115, %v845
  %v848 = vrot.slane %v731, 4
  %849 = vrot.lane.b32.xlu0 %v848, 112
  %v850 = vpop.permute.xlu0 %849
  %v852 = vmul.f32 %v115, %v850
  %854 = vrot.lane.b32.xlu0 %v852, 16
  %v855 = vpop.permute.xlu0 %854
  %v857 = vsel %vm36, %v847, %v855
  %v858 = vmax.f32 %v857, 0.0
  %v859 = vld [vmem:[%s3] sm:$0xff]
  %v860 = vld [vmem:[%s3 + $0x8] sm:$0xff]
  %v861 = vld [vmem:[%s3 + $0x10] sm:$0xff]
  %v862 = vld [vmem:[%s3 + $0x18] sm:$0xff]
  %v864 = vrot.slane %v858, 6
  %v865 = vsel %vm129, %v864, 0
  %867 = vmatprep.subr.mxu0 0.0
  %868 = vmatpush1.msra.mxu0 %v859
  %869 = vmatprep.subr.mxu0 0.0
  %870 = vmatpush1.msra.mxu0 %v860
  %871 = vmatprep.subr.mxu0 0.0
  %872 = vmatpush1.msra.mxu0 %v861
  %873 = vmatprep.subr.mxu0 0.0
  %874 = vmatpush1.msra.mxu0 %v862
  %875 = vmatprep.subr.mxu0 0.0
  %876 = vmatpush1.msra.mxu0 0.0
  %877 = vmatprep.subr.mxu0 0.0
  %878 = vmatpush1.msra.mxu0 0.0
  %879 = vmatprep.subr.mxu0 0.0
  %880 = vmatpush1.msra.mxu0 0.0
  %881 = vmatprep.subr.mxu0 0.0
  %882 = vmatpush1.msra.mxu0 0.0
  %883 = vmatprep.subr.mxu0 0.0
  %884 = vmatpush1.msra.mxu0 0.0
  %885 = vmatprep.subr.mxu0 0.0
  %886 = vmatpush1.msra.mxu0 0.0
  %887 = vmatprep.subr.mxu0 0.0
  %888 = vmatpush1.msra.mxu0 0.0
  %889 = vmatprep.subr.mxu0 0.0
  %890 = vmatpush1.msra.mxu0 0.0
  %891 = vmatprep.subr.mxu0 0.0
  %892 = vmatpush1.msra.mxu0 0.0
  %893 = vmatprep.subr.mxu0 0.0
  %894 = vmatpush1.msra.mxu0 0.0
  %895 = vmatprep.subr.mxu0 0.0
  %896 = vmatpush1.msra.mxu0 0.0
  %897 = vmatprep.subr.mxu0 0.0
  %898 = vmatpush1.msra.mxu0 0.0
  %899 = vmatprep.subr.mxu0 0.0
  %900 = vmatpush1.msra.mxu0 0.0
  %901 = vmatprep.subr.mxu0 0.0
  %902 = vmatpush1.msra.mxu0 0.0
  %903 = vmatprep.subr.mxu0 0.0
  %904 = vmatpush1.msra.mxu0 0.0
  %905 = vmatprep.subr.mxu0 0.0
  %906 = vmatpush1.msra.mxu0 0.0
  %907 = vmatprep.subr.mxu0 0.0
  %908 = vmatpush1.msra.mxu0 0.0
  %909 = vmatprep.subr.mxu0 0.0
  %910 = vmatpush1.msra.mxu0 0.0
  %911 = vmatprep.subr.mxu0 0.0
  %912 = vmatpush1.msra.mxu0 0.0
  %913 = vmatprep.subr.mxu0 0.0
  %914 = vmatpush1.msra.mxu0 0.0
  %915 = vmatprep.subr.mxu0 0.0
  %916 = vmatpush1.msra.mxu0 0.0
  %917 = vmatprep.subr.mxu0 0.0
  %918 = vmatpush1.msra.mxu0 0.0
  %919 = vmatprep.subr.mxu0 0.0
  %920 = vmatpush1.msra.mxu0 0.0
  %921 = vmatprep.subr.mxu0 0.0
  %922 = vmatpush1.msra.mxu0 0.0
  %923 = vmatprep.subr.mxu0 0.0
  %924 = vmatpush1.msra.mxu0 0.0
  %925 = vmatprep.subr.mxu0 0.0
  %926 = vmatpush1.msra.mxu0 0.0
  %927 = vmatprep.subr.mxu0 0.0
  %928 = vmatpush1.msra.mxu0 0.0
  %929 = vmatprep.subr.mxu0 0.0
  %930 = vmatpush1.msra.mxu0 0.0
  %931 = vmatprep.mubr.f32.mxu0 0.0
  %932 = vmatmul.mubr.f32.gmra.mrb[0].mxu0 %v865
  %v933 = vpop.f32.mrb[0].mxu0
  %v934 = vadd.f32 0.0, %v933
  %v935 = vpop.f32.mrb[0].mxu0
  %936 = vdwg.mxu0
  %v938 = vrot.slane %v934, 2
  %939 = vrot.lane.b32.xlu0 %v938, 16
  %v940 = vpop.permute.xlu0 %939
  %v942 = vadd.f32 %v115, %v940
  %v943 = vmax.f32 %v942, 0.0
  %945 = vrot.lane.b32.xlu0 %v943, 112
  %v946 = vpop.permute.xlu0 %945
  %948 = vst.msk [vmem:[#allocation2 + $0x8] sm:$0xc0] %vm525, %v946
  %v949 = vld [vmem:[#allocation2] sm:$0xff]
  %v950 = vld [vmem:[#allocation2 + $0x8] sm:$0xff]
  %v951 = vld [vmem:[%s4] sm:$0xff]
  %v952 = vld [vmem:[%s4 + $0x8] sm:$0xff]
  %v953 = vld [vmem:[%s5] sm:$0x1]
  %v955 = vlaneseq
  %v956 = vshrl.u32 %v955, 7
  %v957 = vsub.s32 0, %v956
  %v958 = vrot.slane %v953, %v957
  %v961 = vsel %vm36, %v949, 0
  %v964 = vsel %vm36, %v950, 0
  %966 = vmatprep.subr.mxu0 0.0
  %967 = vmatpush1.msra.mxu0 %v951
  %968 = vmatprep.subr.mxu0 0.0
  %969 = vmatpush1.msra.mxu0 %v952
  %970 = vmatprep.subr.mxu0 0.0
  %971 = vmatpush1.msra.mxu0 0.0
  %972 = vmatprep.subr.mxu0 0.0
  %973 = vmatpush1.msra.mxu0 0.0
  %974 = vmatprep.subr.mxu0 0.0
  %975 = vmatpush1.msra.mxu0 0.0
  %976 = vmatprep.subr.mxu0 0.0
  %977 = vmatpush1.msra.mxu0 0.0
  %978 = vmatprep.subr.mxu0 0.0
  %979 = vmatpush1.msra.mxu0 0.0
  %980 = vmatprep.subr.mxu0 0.0
  %981 = vmatpush1.msra.mxu0 0.0
  %982 = vmatprep.subr.mxu0 0.0
  %983 = vmatpush1.msra.mxu0 0.0
  %984 = vmatprep.subr.mxu0 0.0
  %985 = vmatpush1.msra.mxu0 0.0
  %986 = vmatprep.subr.mxu0 0.0
  %987 = vmatpush1.msra.mxu0 0.0
  %988 = vmatprep.subr.mxu0 0.0
  %989 = vmatpush1.msra.mxu0 0.0
  %990 = vmatprep.subr.mxu0 0.0
  %991 = vmatpush1.msra.mxu0 0.0
  %992 = vmatprep.subr.mxu0 0.0
  %993 = vmatpush1.msra.mxu0 0.0
  %994 = vmatprep.subr.mxu0 0.0
  %995 = vmatpush1.msra.mxu0 0.0
  %996 = vmatprep.subr.mxu0 0.0
  %997 = vmatpush1.msra.mxu0 0.0
  %998 = vmatprep.subr.mxu0 0.0
  %999 = vmatpush1.msra.mxu0 0.0
  %1000 = vmatprep.subr.mxu0 0.0
  %1001 = vmatpush1.msra.mxu0 0.0
  %1002 = vmatprep.subr.mxu0 0.0
  %1003 = vmatpush1.msra.mxu0 0.0
  %1004 = vmatprep.subr.mxu0 0.0
  %1005 = vmatpush1.msra.mxu0 0.0
  %1006 = vmatprep.subr.mxu0 0.0
  %1007 = vmatpush1.msra.mxu0 0.0
  %1008 = vmatprep.subr.mxu0 0.0
  %1009 = vmatpush1.msra.mxu0 0.0
  %1010 = vmatprep.subr.mxu0 0.0
  %1011 = vmatpush1.msra.mxu0 0.0
  %1012 = vmatprep.subr.mxu0 0.0
  %1013 = vmatpush1.msra.mxu0 0.0
  %1014 = vmatprep.subr.mxu0 0.0
  %1015 = vmatpush1.msra.mxu0 0.0
  %1016 = vmatprep.subr.mxu0 0.0
  %1017 = vmatpush1.msra.mxu0 0.0
  %1018 = vmatprep.subr.mxu0 0.0
  %1019 = vmatpush1.msra.mxu0 0.0
  %1020 = vmatprep.subr.mxu0 0.0
  %1021 = vmatpush1.msra.mxu0 0.0
  %1022 = vmatprep.subr.mxu0 0.0
  %1023 = vmatpush1.msra.mxu0 0.0
  %1024 = vmatprep.subr.mxu0 0.0
  %1025 = vmatpush1.msra.mxu0 0.0
  %1026 = vmatprep.subr.mxu0 0.0
  %1027 = vmatpush1.msra.mxu0 0.0
  %1028 = vmatprep.subr.mxu0 0.0
  %1029 = vmatpush1.msra.mxu0 0.0
  %1030 = vmatprep.mubr.f32.mxu0 0.0
  %1031 = vmatmul.mubr.f32.gmra.mrb[0].mxu0 %v961
  %v1032 = vpop.f32.mrb[0].mxu0
  %v1033 = vadd.f32 %v958, %v1032
  %v1034 = vpop.f32.mrb[0].mxu0
  %1035 = vmatprep.mubr.f32.mxu0 0.0
  %1036 = vmatmul.mubr.f32.gmra.mrb[0].mxu0 %v964
  %v1037 = vpop.f32.mrb[0].mxu0
  %v1038 = vadd.f32 %v958, %v1037
  %v1039 = vpop.f32.mrb[0].mxu0
  %1040 = vdwg.mxu0
  %vm1041 = vcmask 39936
  %v1042 = vsel %vm1041, %v1033, -inf
  %1043 = vmax.xlane.f32.xlu0 %v1042
  %v1044 = vpop.xlane.xlu0 %1043
  %v1045 = vsel %vm1041, %v1038, -inf
  %1046 = vmax.xlane.f32.xlu0 %v1045
  %v1047 = vpop.xlane.xlu0 %1046
  %v1048 = vsub.f32 %v1033, %v1044
  %v1049 = vsub.f32 %v1038, %v1047
  %v1050 = vmul.f32 %v1048, 1.442695
  %v1051 = vpow.pop %v1050
  %v1052 = vmul.f32 %v1049, 1.442695
  %v1053 = vpow.pop %v1052
  %v1054 = vsel %vm1041, %v1051, 0.0
  %1055 = vadd.xlane.f32.xlu0 %v1054
  %v1056 = vpop.xlane.xlu0 %1055
  %v1057 = vsel %vm1041, %v1053, 0.0
  %1058 = vadd.xlane.f32.xlu0 %v1057
  %v1059 = vpop.xlane.xlu0 %1058
  %v1060 = vlog2.pop %v1056
  %v1061 = vmul.f32 %v1060, 0.6931472
  %v1062 = vlog2.pop %v1059
  %v1063 = vmul.f32 %v1062, 0.6931472
  %v1064 = vsub.f32 %v1048, %v1061
  %v1065 = vsub.f32 %v1049, %v1063
  %1066 = vst.msk [vmem:[%s6] sm:$0xff] %vm1041, %v1064
  %1067 = vst.msk [vmem:[%s6 + $0x8] sm:$0xff] %vm1041, %v1065
  // Predicated region
  $region26: #{tpu_custom_call.1} parent=0 // pred_check
    _
  $region27: #{tpu_custom_call.1} parent=0 // pred_check_branch
    %1069 = sbr.rel (0) target = $region29
  $region28: #{tpu_custom_call.1} parent=0 // pred_region
    _
  $region29: #{tpu_custom_call.1} parent=0 // pred_fallthru
    _
  // Predicated region
  $region30: #{tpu_custom_call.1} parent=0 // pred_check
    _
  $region31: #{tpu_custom_call.1} parent=0 // pred_check_branch
    %1071 = sbr.rel (0) target = $region33
  $region32: #{tpu_custom_call.1} parent=0 // pred_region
    _
  $region33: #{tpu_custom_call.1} parent=0 // pred_fallthru
    _

</llo_original>
